<compile_context>
chip_gen: v7x
topology: tpu7x:2x2x1
jax: 0.10.0
libtpu: 0.0.40
codegen_flags: <defaults>
</compile_context>

<pallas_src>
import jax
import jax.numpy as jnp
import numpy as np
from jax import lax
from jax.experimental import pallas as pl
from jax.experimental.pallas import tpu as pltpu

LANE = 128


def _round_up(n, m):
    return ((n + m - 1) // m) * m


def _largest_divisor(n, cap):
    cap = max(1, min(n, cap))
    for d in range(cap, 0, -1):
        if n % d == 0:
            return d
    return 1


# --------------------------- Phase A: input projection ---------------------------
# gi = relu(x @ W1^T + b1) @ W_ih^T + b3   (h-independent, batched over T*B rows)

def _input_proj_kernel(x_ref, w1_ref, b1_ref, wih_ref, b3_ref, gi_ref):
    f32 = jnp.float32
    x1 = jnp.maximum(
        jnp.dot(x_ref[...].astype(f32), w1_ref[...], preferred_element_type=f32)
        + b1_ref[...], 0.0)
    gi_ref[...] = (jnp.dot(x1, wih_ref[...], preferred_element_type=f32)
                   + b3_ref[...]).astype(gi_ref.dtype)


def _input_projection(xs_flat, prep, rows_per_step):
    TB, Din = xs_flat.shape
    Hp = prep["Hp"]
    grid = (TB // rows_per_step,)
    return pl.pallas_call(
        _input_proj_kernel,
        out_shape=jax.ShapeDtypeStruct((TB, 3 * Hp), jnp.float32),
        grid_spec=pltpu.PrefetchScalarGridSpec(
            num_scalar_prefetch=0,
            grid=grid,
            in_specs=[
                pl.BlockSpec((rows_per_step, Din), lambda i: (i, 0)),
                pl.BlockSpec((Din, Hp), lambda i: (0, 0)),
                pl.BlockSpec((1, Hp), lambda i: (0, 0)),
                pl.BlockSpec((Hp, 3 * Hp), lambda i: (0, 0)),
                pl.BlockSpec((1, 3 * Hp), lambda i: (0, 0)),
            ],
            out_specs=pl.BlockSpec((rows_per_step, 3 * Hp), lambda i: (i, 0)),
        ),
        compiler_params=pltpu.CompilerParams(
            dimension_semantics=("parallel",)),
    )(xs_flat, prep["w1t"], prep["b1"], prep["wih_t"], prep["b3"])


# --------------------------- Phase B: serial GRU recurrence ---------------------------
# Only the h-dependent matmul (h @ W_hh^T) and the gate math run in the serial loop.

def _recurrence_kernel(gi_ref, h0_ref, whh_ref, bhn_ref,
                       hseq_ref, hfin_ref, h_scratch):
    f32 = jnp.float32
    g = pl.program_id(0)
    Tt = gi_ref.shape[0]
    Hp = h_scratch.shape[1]

    @pl.when(g == 0)
    def _():
        h_scratch[...] = h0_ref[...].astype(f32)

    whh = whh_ref[...]          # (Hp, 3Hp), VMEM-resident across all grid steps
    bhn = bhn_ref[...]          # (1, Hp)

    def step(i, h):
        gi = gi_ref[i]                                            # (B, 3Hp)
        gh = jnp.dot(h, whh, preferred_element_type=f32)          # (B, 3Hp)
        r = jax.nn.sigmoid(gi[:, :Hp] + gh[:, :Hp])
        z = jax.nn.sigmoid(gi[:, Hp:2 * Hp] + gh[:, Hp:2 * Hp])
        n = jnp.tanh(gi[:, 2 * Hp:] + r * (gh[:, 2 * Hp:] + bhn))
        h_new = (1.0 - z) * n + z * h
        hseq_ref[i] = h_new.astype(hseq_ref.dtype)                # lane-dense (B, Hp) store
        return h_new

    h_last = lax.fori_loop(0, Tt, step, h_scratch[...], unroll=True)
    h_scratch[...] = h_last

    @pl.when(g == pl.num_programs(0) - 1)
    def _():
        hfin_ref[...] = h_last.astype(hfin_ref.dtype)             # written once, at the end


def _recurrence(gi, h0_p, prep, Tt):
    T, B, _ = gi.shape
    Hp = prep["Hp"]
    grid = (T // Tt,)
    # TODO(synk): for v7x megacore, a leading 'parallel' grid axis over batch
    # groups (h_scratch shaped (Bg, Hp)) would use both TensorCores; omitted here
    # since the demo B is tiny and it is a no-op on v5e/v6e.
    return pl.pallas_call(
        _recurrence_kernel,
        out_shape=(
            jax.ShapeDtypeStruct((T, B, Hp), jnp.float32),
            jax.ShapeDtypeStruct((B, Hp), jnp.float32),
        ),
        grid_spec=pltpu.PrefetchScalarGridSpec(
            num_scalar_prefetch=0,
            grid=grid,
            in_specs=[
                pl.BlockSpec((Tt, B, 3 * Hp), lambda g: (g, 0, 0)),  # per-step gi slab
                pl.BlockSpec((B, Hp), lambda g: (0, 0)),             # h0, read at g==0
                pl.BlockSpec((Hp, 3 * Hp), lambda g: (0, 0)),        # W_hh^T resident
                pl.BlockSpec((1, Hp), lambda g: (0, 0)),             # b_hn resident
            ],
            out_specs=(
                pl.BlockSpec((Tt, B, Hp), lambda g: (g, 0, 0)),      # h sequence
                pl.BlockSpec((B, Hp), lambda g: (0, 0)),             # final h, resident
            ),
            scratch_shapes=[pltpu.VMEM((B, Hp), jnp.float32)],       # f32 carry
        ),
        compiler_params=pltpu.CompilerParams(
            dimension_semantics=("arbitrary",)),                      # recurrence axis
    )(gi, h0_p, prep["whh_t"], prep["bhn"])


# --------------------------- Phase C: output head ---------------------------
# out = h_seq @ W2^T + b2   (batched over T*B rows, lane-dense padded out_dim)

def _head_kernel(h_ref, w2_ref, b2_ref, out_ref):
    f32 = jnp.float32
    out_ref[...] = (jnp.dot(h_ref[...].astype(f32), w2_ref[...],
                            preferred_element_type=f32)
                    + b2_ref[...]).astype(out_ref.dtype)


def _head(h_flat, prep, rows_per_step):
    TB, Hp = h_flat.shape
    Op = prep["Op"]
    grid = (TB // rows_per_step,)
    return pl.pallas_call(
        _head_kernel,
        out_shape=jax.ShapeDtypeStruct((TB, Op), jnp.float32),
        grid_spec=pltpu.PrefetchScalarGridSpec(
            num_scalar_prefetch=0,
            grid=grid,
            in_specs=[
                pl.BlockSpec((rows_per_step, Hp), lambda i: (i, 0)),
                pl.BlockSpec((Hp, Op), lambda i: (0, 0)),
                pl.BlockSpec((1, Op), lambda i: (0, 0)),
            ],
            out_specs=pl.BlockSpec((rows_per_step, Op), lambda i: (i, 0)),
        ),
        compiler_params=pltpu.CompilerParams(
            dimension_semantics=("parallel",)),
    )(h_flat, prep["w2t"], prep["b2"])


# --------------------------- host-side parameter prep ---------------------------

def prepare_params(params):
    """One-time parameter prep: transpose, per-gate 128-lane padding, bias fusion."""
    H = params["w_hh"].shape[1]
    Din = params["w1"].shape[1]
    Odim = params["w2"].shape[0]
    Hp = _round_up(H, LANE)
    Op = _round_up(Odim, LANE)

    w1 = np.asarray(params["w1"], np.float32)      # (H, Din)
    b1 = np.asarray(params["b1"], np.float32)
    w_ih = np.asarray(params["w_ih"], np.float32)  # (3H, H)
    w_hh = np.asarray(params["w_hh"], np.float32)  # (3H, H)
    b_ih = np.asarray(params["b_ih"], np.float32)
    b_hh = np.asarray(params["b_hh"], np.float32)
    w2 = np.asarray(params["w2"], np.float32)      # (Odim, H)
    b2 = np.asarray(params["b2"], np.float32)

    w1t = np.zeros((Din, Hp), np.float32)
    w1t[:, :H] = w1.T
    b1p = np.zeros((1, Hp), np.float32)
    b1p[0, :H] = b1

    # Per-gate packing: gate g occupies lanes [g*Hp, g*Hp+H); rest is zero so
    # padded hidden columns stay exactly 0 through the recurrence.
    wih_t = np.zeros((Hp, 3 * Hp), np.float32)
    whh_t = np.zeros((Hp, 3 * Hp), np.float32)
    b3 = np.zeros((1, 3 * Hp), np.float32)
    gate_bias = [b_ih[:H] + b_hh[:H],            # r: input+hidden bias combined
                 b_ih[H:2 * H] + b_hh[H:2 * H],  # z: input+hidden bias combined
                 b_ih[2 * H:]]                   # n: input-side bias only
    for g in range(3):
        wih_t[:H, g * Hp:g * Hp + H] = w_ih[g * H:(g + 1) * H, :].T
        whh_t[:H, g * Hp:g * Hp + H] = w_hh[g * H:(g + 1) * H, :].T
        b3[0, g * Hp:g * Hp + H] = gate_bias[g]
    bhn = np.zeros((1, Hp), np.float32)
    bhn[0, :H] = b_hh[2 * H:]

    w2t = np.zeros((Hp, Op), np.float32)
    w2t[:H, :Odim] = w2.T
    b2p = np.zeros((1, Op), np.float32)
    b2p[0, :Odim] = b2

    return {
        "H": H, "Hp": Hp, "Din": Din, "out_dim": Odim, "Op": Op,
        "w1t": jnp.asarray(w1t), "b1": jnp.asarray(b1p),
        "wih_t": jnp.asarray(wih_t), "whh_t": jnp.asarray(whh_t),
        "b3": jnp.asarray(b3), "bhn": jnp.asarray(bhn),
        "w2t": jnp.asarray(w2t), "b2": jnp.asarray(b2p),
    }


# --------------------------- public forward wrappers ---------------------------

def recurrent_network_sequence_forward(xs, h0, prep):
    """Run T recurrent steps. xs: (T, B, input_dim), h0: (B, H).
    Returns (out_seq (T, B, out_dim), h_final (B, H))."""
    T, B, Din = xs.shape
    H, Hp, Odim, Op = prep["H"], prep["Hp"], prep["out_dim"], prep["Op"]

    # Time blocking: batched phases want many rows per grid step; the serial
    # phase blocks Tt timesteps per grid iteration to amortize step overhead.
    if B % 8 == 0:
        Ta = _largest_divisor(T, max(1, 512 // B))
    else:
        Ta = T                                  # full block (no sublane constraint)
    Tt = _largest_divisor(T, 32)
    rows = Ta * B

    # Phase A: all h-independent matmuls, batched over T*B rows.
    xs_flat = xs.reshape(T * B, Din)
    gi = _input_projection(xs_flat, prep, rows).reshape(T, B, 3 * Hp)

    # Phase B: serial recurrence (only h @ W_hh^T + gate math per step).
    h0_p = jnp.pad(h0.astype(jnp.float32), ((0, 0), (0, Hp - H)))
    h_seq, h_fin = _recurrence(gi, h0_p, prep, Tt)

    # Phase C: fc2 over the stacked hidden states, one batched matmul.
    out_flat = _head(h_seq.reshape(T * B, Hp), prep, rows)
    out = out_flat.reshape(T, B, Op)[:, :, :Odim].astype(xs.dtype)
    h_final = h_fin[:, :H].astype(h0.dtype)
    return out, h_final


def recurrent_network_forward(x, h_in, prep):
    """Single-step module forward (same semantics as PyTorch forward)."""
    out_seq, h = recurrent_network_sequence_forward(x[None], h_in, prep)
    return out_seq[0], h


# ---------------------- pure-JAX reference (PyTorch semantics) ----------------------

def _reference_step(x, h, params):
    H = params["w_hh"].shape[1]
    x1 = jnp.maximum(x @ params["w1"].T + params["b1"], 0.0)
    gi = x1 @ params["w_ih"].T + params["b_ih"]
    gh = h @ params["w_hh"].T + params["b_hh"]
    r = jax.nn.sigmoid(gi[:, :H] + gh[:, :H])
    z = jax.nn.sigmoid(gi[:, H:2 * H] + gh[:, H:2 * H])
    n = jnp.tanh(gi[:, 2 * H:] + r * gh[:, 2 * H:])
    h_new = (1.0 - z) * n + z * h
    out = h_new @ params["w2"].T + params["b2"]
    return out, h_new


def _reference_sequence(xs, h0, params):
    def body(h, x):
        out, h_new = _reference_step(x, h, params)
        return h_new, out
    h_final, outs = jax.lax.scan(body, h0, xs)
    return outs, h_final


def make_params(key, input_dim, hidden_dim, out_dim):
    ks = jax.random.split(key, 8)
    sc = 0.1
    return {
        "w1":   sc * jax.random.normal(ks[0], (hidden_dim, input_dim), jnp.float32),
        "b1":   sc * jax.random.normal(ks[1], (hidden_dim,), jnp.float32),
        "w_ih": sc * jax.random.normal(ks[2], (3 * hidden_dim, hidden_dim), jnp.float32),
        "w_hh": sc * jax.random.normal(ks[3], (3 * hidden_dim, hidden_dim), jnp.float32),
        "b_ih": sc * jax.random.normal(ks[4], (3 * hidden_dim,), jnp.float32),
        "b_hh": sc * jax.random.normal(ks[5], (3 * hidden_dim,), jnp.float32),
        "w2":   sc * jax.random.normal(ks[6], (out_dim, hidden_dim), jnp.float32),
        "b2":   sc * jax.random.normal(ks[7], (out_dim,), jnp.float32),
    }


if __name__ == "__main__":
    T, B, input_dim, hidden_dim, out_dim = 8, 8, 16, 64, 8

    key = jax.random.PRNGKey(0)
    k_x, k_h, k_p = jax.random.split(key, 3)
    xs = jax.random.normal(k_x, (T, B, input_dim), jnp.float32)
    h0 = jax.random.normal(k_h, (B, hidden_dim), jnp.float32)
    params = make_params(k_p, input_dim, hidden_dim, out_dim)
    prep = prepare_params(params)

    # Fused T-step forward (3 Pallas phases).
    out_seq, h_final = recurrent_network_sequence_forward(xs, h0, prep)
    out_seq = jax.block_until_ready(out_seq)
    h_final = jax.block_until_ready(h_final)

    out_seq_ref, h_final_ref = _reference_sequence(xs, h0, params)
    np.testing.assert_allclose(np.asarray(out_seq), np.asarray(out_seq_ref), rtol=1e-5, atol=1e-5)
    np.testing.assert_allclose(np.asarray(h_final), np.asarray(h_final_ref), rtol=1e-5, atol=1e-5)

    # Single-step module forward (T=1 special case) also matches.
    out1, h1 = recurrent_network_forward(xs[0], h0, prep)
    out1 = jax.block_until_ready(out1)
    out1_ref, h1_ref = _reference_step(xs[0], h0, params)
    np.testing.assert_allclose(np.asarray(out1), np.asarray(out1_ref), rtol=1e-5, atol=1e-5)
    np.testing.assert_allclose(np.asarray(h1), np.asarray(h1_ref), rtol=1e-5, atol=1e-5)

    print("KERNEL_OK")
</pallas_src>

<mosaic_0001>
module attributes {stable_mosaic.version = 11 : i64} {
  func.func @_input_proj_kernel(%arg0: i32, %arg1: memref<64x16xf32, #tpu.memory_space<vmem>>, %arg2: memref<16x128xf32, #tpu.memory_space<vmem>>, %arg3: memref<1x128xf32, #tpu.memory_space<vmem>>, %arg4: memref<128x384xf32, #tpu.memory_space<vmem>>, %arg5: memref<1x384xf32, #tpu.memory_space<vmem>>, %arg6: memref<64x384xf32, #tpu.memory_space<vmem>>) attributes {dimension_semantics = [#tpu.dimension_semantics<parallel>], iteration_bounds = array<i64: 1>, scalar_prefetch = 0 : i64, scratch_operands = 0 : i64, tpu.core_type = #tpu.core_type<tc>, window_params = [{transform_indices = @transform_0, window_bounds = array<i64: 64, 16>}, {pipeline_mode = #tpu.pipeline_mode<synchronous>, transform_indices = @transform_1, window_bounds = array<i64: 16, 128>}, {pipeline_mode = #tpu.pipeline_mode<synchronous>, transform_indices = @transform_2, window_bounds = array<i64: 1, 128>}, {pipeline_mode = #tpu.pipeline_mode<synchronous>, transform_indices = @transform_3, window_bounds = array<i64: 128, 384>}, {pipeline_mode = #tpu.pipeline_mode<synchronous>, transform_indices = @transform_4, window_bounds = array<i64: 1, 384>}, {transform_indices = @transform_5, window_bounds = array<i64: 64, 384>}]} {
    %c0 = arith.constant 0 : index
    %c0_0 = arith.constant 0 : index
    %0 = vector.load %arg1[%c0, %c0_0] : memref<64x16xf32, #tpu.memory_space<vmem>>, vector<64x16xf32>
    %c0_1 = arith.constant 0 : index
    %c0_2 = arith.constant 0 : index
    %1 = vector.load %arg2[%c0_1, %c0_2] : memref<16x128xf32, #tpu.memory_space<vmem>>, vector<16x128xf32>
    %cst = arith.constant dense<0.000000e+00> : vector<64x128xf32>
    %2 = tpu.matmul %0, %1, %cst {dimension_numbers = #tpu.dot_dimension_numbers<[1], [0], [0], [1], [0, 0, 1, 1], [], []>} : vector<64x16xf32>, vector<16x128xf32>, vector<64x128xf32> -> vector<64x128xf32>
    %c0_3 = arith.constant 0 : index
    %c0_4 = arith.constant 0 : index
    %3 = vector.load %arg3[%c0_3, %c0_4] : memref<1x128xf32, #tpu.memory_space<vmem>>, vector<1x128xf32>
    %4 = vector.broadcast %3 : vector<1x128xf32> to vector<64x128xf32>
    %5 = arith.addf %2, %4 : vector<64x128xf32>
    %cst_5 = arith.constant 0.000000e+00 : f32
    %6 = vector.broadcast %cst_5 : f32 to vector<64x128xf32>
    %7 = arith.maximumf %5, %6 : vector<64x128xf32>
    %c0_6 = arith.constant 0 : index
    %c0_7 = arith.constant 0 : index
    %8 = vector.load %arg4[%c0_6, %c0_7] : memref<128x384xf32, #tpu.memory_space<vmem>>, vector<128x384xf32>
    %cst_8 = arith.constant dense<0.000000e+00> : vector<64x384xf32>
    %9 = tpu.matmul %7, %8, %cst_8 {dimension_numbers = #tpu.dot_dimension_numbers<[1], [0], [0], [1], [0, 0, 1, 1], [], []>} : vector<64x128xf32>, vector<128x384xf32>, vector<64x384xf32> -> vector<64x384xf32>
    %c0_9 = arith.constant 0 : index
    %c0_10 = arith.constant 0 : index
    %10 = vector.load %arg5[%c0_9, %c0_10] : memref<1x384xf32, #tpu.memory_space<vmem>>, vector<1x384xf32>
    %11 = vector.broadcast %10 : vector<1x384xf32> to vector<64x384xf32>
    %12 = arith.addf %9, %11 : vector<64x384xf32>
    %c0_11 = arith.constant 0 : index
    %c0_12 = arith.constant 0 : index
    %13 = vector.load %arg6[%c0_11, %c0_12] : memref<64x384xf32, #tpu.memory_space<vmem>>, vector<64x384xf32>
    tpu.vector_store %arg6[%c0_11, %c0_12], %12 {strides = array<i32>} : memref<64x384xf32, #tpu.memory_space<vmem>>, vector<64x384xf32>,
    return
  }
  func.func @transform_0(%arg0: i32) -> (i32, i32) {
    %c0_i32 = arith.constant 0 : i32
    %c0_i32_0 = arith.constant 0 : i32
    return %arg0, %c0_i32 : i32, i32
  }
  func.func @transform_1(%arg0: i32) -> (i32, i32) {
    %c0_i32 = arith.constant 0 : i32
    %c0_i32_0 = arith.constant 0 : i32
    %c0_i32_1 = arith.constant 0 : i32
    return %c0_i32, %c0_i32_0 : i32, i32
  }
  func.func @transform_2(%arg0: i32) -> (i32, i32) {
    %c0_i32 = arith.constant 0 : i32
    %c0_i32_0 = arith.constant 0 : i32
    %c0_i32_1 = arith.constant 0 : i32
    return %c0_i32, %c0_i32_0 : i32, i32
  }
  func.func @transform_3(%arg0: i32) -> (i32, i32) {
    %c0_i32 = arith.constant 0 : i32
    %c0_i32_0 = arith.constant 0 : i32
    %c0_i32_1 = arith.constant 0 : i32
    return %c0_i32, %c0_i32_0 : i32, i32
  }
  func.func @transform_4(%arg0: i32) -> (i32, i32) {
    %c0_i32 = arith.constant 0 : i32
    %c0_i32_0 = arith.constant 0 : i32
    %c0_i32_1 = arith.constant 0 : i32
    return %c0_i32, %c0_i32_0 : i32, i32
  }
  func.func @transform_5(%arg0: i32) -> (i32, i32) {
    %c0_i32 = arith.constant 0 : i32
    %c0_i32_0 = arith.constant 0 : i32
    return %arg0, %c0_i32 : i32, i32
  }
}

</mosaic_0001>

<llo_original>
// kernel: tpu_custom_call.1
$region0: #{tpu_custom_call.1}
  #allocation0 [shape = 'u32[]', space=smem, size = 0x4, offset = 0x4, fixed_abs, tag = 'smem constant byte address 0x4 - core index']
  #allocation1 [shape = 'u32[144,128]{1,0:T(1,128)}', space=vmem, size = 0x12000, scoped, tag = 'internal scratch']
  %s0 = inlined_call_operand.vmem [shape: f32[64,16], index: 0, kind: input, shape index: {}]
  %s1 = inlined_call_operand.vmem [shape: f32[16,128], index: 1, kind: input, shape index: {}]
  %s2 = inlined_call_operand.vmem [shape: f32[1,128], index: 2, kind: input, shape index: {}]
  %s3 = inlined_call_operand.hbm [shape: f32[128,384], index: 3, kind: input, shape index: {}]
  %s4 = inlined_call_operand.vmem [shape: f32[1,384], index: 4, kind: input, shape index: {}]
  %s5 = inlined_call_operand.hbm [shape: f32[64,384], index: 5, kind: output, shape index: {}]
  %s6 = sld [smem:[#allocation0]]
  $region34: #{tpu_custom_call.1} parent=0
    _
  %s8 = ssub.s32 1, %s6
  %s9 = scalar_select 0, %s8, %s6
  $region1: #{tpu_custom_call.1} parent=0
    #allocation2 [shape = 'u8[196608]{0}', space=vmem, size = 0x30000, scoped, tag = 'input window, operand 3, single buffered']
    #allocation3 [shape = 's32[1]{0}', space=sflag, size = 0x4, scoped, tag = 'scoped memory for tpu_custom_call.1']
    #allocation4 [shape = 's32[1]{0}', space=sflag, size = 0x4, scoped, tag = 'scoped memory for tpu_custom_call.1']
    #allocation5 [shape = 'u8[98304]{0}', space=vmem, size = 0x18000, scoped, tag = 'output window, operand 0, single buffered']
    %10 = vsyncpa [#allocation3], 0
    %11 = vsyncpa [#allocation4], 0
    // Predicated region
    $region2: #{tpu_custom_call.1} parent=1 // pred_check
      _
    $region3: #{tpu_custom_call.1} parent=1 // pred_check_branch
      %13 = sbr.rel (0) target = $region5
    $region4: #{tpu_custom_call.1} parent=1 // pred_region
      _
    $region5: #{tpu_custom_call.1} parent=1 // pred_fallthru
      _
    // Predicated region
    $region6: #{tpu_custom_call.1} parent=1 // pred_check
      _
    $region7: #{tpu_custom_call.1} parent=1 // pred_check_branch
      %15 = sbr.rel (0) target = $region9
    $region8: #{tpu_custom_call.1} parent=1 // pred_region
      _
    $region9: #{tpu_custom_call.1} parent=1 // pred_fallthru
      _
    // Predicated region
    $region10: #{tpu_custom_call.1} parent=1 // pred_check
      _
    $region11: #{tpu_custom_call.1} parent=1 // pred_check_branch
      %17 = sbr.rel (0) target = $region13
    $region12: #{tpu_custom_call.1} parent=1 // pred_region
      _
    $region13: #{tpu_custom_call.1} parent=1 // pred_fallthru
      _
    // Predicated region
    $region14: #{tpu_custom_call.1} parent=1 // pred_check
      _
    $region15: #{tpu_custom_call.1} parent=1 // pred_check_branch
      %19 = sbr.rel (0) target = $region17
    $region16: #{tpu_custom_call.1} parent=1 // pred_region
      %s21 = ssub.s32 6144, 6144
      %22 = vsyncadd [#allocation3], %s21
      %s23 = sshll.u32 [#allocation2], 4
      %s24 = int_to_ptr.vmem [resolvable:$true] %s23
      %29 = dma.hbm_to_vmem [thread:$0]  %s3, 6144, %s24, [#allocation3], 384, 384, 24
    $region17: #{tpu_custom_call.1} parent=1 // pred_fallthru
      _
    // Predicated region
    $region18: #{tpu_custom_call.1} parent=1 // pred_check
      _
    $region19: #{tpu_custom_call.1} parent=1 // pred_check_branch
      %31 = sbr.rel (0) target = $region21
    $region20: #{tpu_custom_call.1} parent=1 // pred_region
      _
    $region21: #{tpu_custom_call.1} parent=1 // pred_fallthru
      _
    // Predicated region
    $region22: #{tpu_custom_call.1} parent=1 // pred_check
      _
    $region23: #{tpu_custom_call.1} parent=1 // pred_check_branch
      %33 = sbr.rel (0) target = $region25
    $region24: #{tpu_custom_call.1} parent=1 // pred_region
      %34 = dma.done [#allocation3], 6144
    $region25: #{tpu_custom_call.1} parent=1 // pred_fallthru
      _
    %v35 = vld [vmem:[%s0] sm:$0xff]
    %v36 = vld [vmem:[%s0 + $0x8] sm:$0xff]
    %v37 = vld [vmem:[%s0 + $0x10] sm:$0xff]
    %v38 = vld [vmem:[%s0 + $0x18] sm:$0xff]
    %v39 = vld [vmem:[%s0 + $0x20] sm:$0xff]
    %v40 = vld [vmem:[%s0 + $0x28] sm:$0xff]
    %v41 = vld [vmem:[%s0 + $0x30] sm:$0xff]
    %v42 = vld [vmem:[%s0 + $0x38] sm:$0xff]
    %v43 = vld [vmem:[%s1] sm:$0xff]
    %v44 = vld [vmem:[%s1 + $0x8] sm:$0xff]
    %v45 = vld [vmem:[%s2] sm:$0x1]
    %v47 = vlaneseq
    %v48 = vshrl.u32 %v47, 7
    %v49 = vsub.s32 0, %v48
    %v50 = vrot.slane %v45, %v49
    %vm52 = vcmask 130048
    %v54 = vsel %vm52, %v35, 0
    %v57 = vsel %vm52, %v36, 0
    %v60 = vsel %vm52, %v37, 0
    %v63 = vsel %vm52, %v38, 0
    %v66 = vsel %vm52, %v39, 0
    %v69 = vsel %vm52, %v40, 0
    %v72 = vsel %vm52, %v41, 0
    %v75 = vsel %vm52, %v42, 0
    %77 = vmatprep.subr.mxu0 0.0
    %78 = vmatpush1.msra.mxu0 %v43
    %79 = vmatprep.subr.mxu0 0.0
    %80 = vmatpush1.msra.mxu0 %v44
    %81 = vmatprep.subr.mxu0 0.0
    %82 = vmatpush1.msra.mxu0 0.0
    %83 = vmatprep.subr.mxu0 0.0
    %84 = vmatpush1.msra.mxu0 0.0
    %85 = vmatprep.subr.mxu0 0.0
    %86 = vmatpush1.msra.mxu0 0.0
    %87 = vmatprep.subr.mxu0 0.0
    %88 = vmatpush1.msra.mxu0 0.0
    %89 = vmatprep.subr.mxu0 0.0
    %90 = vmatpush1.msra.mxu0 0.0
    %91 = vmatprep.subr.mxu0 0.0
    %92 = vmatpush1.msra.mxu0 0.0
    %93 = vmatprep.subr.mxu0 0.0
    %94 = vmatpush1.msra.mxu0 0.0
    %95 = vmatprep.subr.mxu0 0.0
    %96 = vmatpush1.msra.mxu0 0.0
    %97 = vmatprep.subr.mxu0 0.0
    %98 = vmatpush1.msra.mxu0 0.0
    %99 = vmatprep.subr.mxu0 0.0
    %100 = vmatpush1.msra.mxu0 0.0
    %101 = vmatprep.subr.mxu0 0.0
    %102 = vmatpush1.msra.mxu0 0.0
    %103 = vmatprep.subr.mxu0 0.0
    %104 = vmatpush1.msra.mxu0 0.0
    %105 = vmatprep.subr.mxu0 0.0
    %106 = vmatpush1.msra.mxu0 0.0
    %107 = vmatprep.subr.mxu0 0.0
    %108 = vmatpush1.msra.mxu0 0.0
    %109 = vmatprep.subr.mxu0 0.0
    %110 = vmatpush1.msra.mxu0 0.0
    %111 = vmatprep.subr.mxu0 0.0
    %112 = vmatpush1.msra.mxu0 0.0
    %113 = vmatprep.subr.mxu0 0.0
    %114 = vmatpush1.msra.mxu0 0.0
    %115 = vmatprep.subr.mxu0 0.0
    %116 = vmatpush1.msra.mxu0 0.0
    %117 = vmatprep.subr.mxu0 0.0
    %118 = vmatpush1.msra.mxu0 0.0
    %119 = vmatprep.subr.mxu0 0.0
    %120 = vmatpush1.msra.mxu0 0.0
    %121 = vmatprep.subr.mxu0 0.0
    %122 = vmatpush1.msra.mxu0 0.0
    %123 = vmatprep.subr.mxu0 0.0
    %124 = vmatpush1.msra.mxu0 0.0
    %125 = vmatprep.subr.mxu0 0.0
    %126 = vmatpush1.msra.mxu0 0.0
    %127 = vmatprep.subr.mxu0 0.0
    %128 = vmatpush1.msra.mxu0 0.0
    %129 = vmatprep.subr.mxu0 0.0
    %130 = vmatpush1.msra.mxu0 0.0
    %131 = vmatprep.subr.mxu0 0.0
    %132 = vmatpush1.msra.mxu0 0.0
    %133 = vmatprep.subr.mxu0 0.0
    %134 = vmatpush1.msra.mxu0 0.0
    %135 = vmatprep.subr.mxu0 0.0
    %136 = vmatpush1.msra.mxu0 0.0
    %137 = vmatprep.subr.mxu0 0.0
    %138 = vmatpush1.msra.mxu0 0.0
    %139 = vmatprep.subr.mxu0 0.0
    %140 = vmatpush1.msra.mxu0 0.0
    %141 = vmatprep.mubr.f32.mxu0 0.0
    %142 = vmatmul.mubr.f32.gmra.mrb[0].mxu0 %v54
    %v143 = vpop.f32.mrb[0].mxu0
    %v144 = vadd.f32 %v50, %v143
    %v145 = vpop.f32.mrb[0].mxu0
    %146 = vmatprep.mubr.f32.mxu0 0.0
    %147 = vmatmul.mubr.f32.gmra.mrb[0].mxu0 %v57
    %v148 = vpop.f32.mrb[0].mxu0
    %v149 = vadd.f32 %v50, %v148
    %v150 = vpop.f32.mrb[0].mxu0
    %151 = vmatprep.mubr.f32.mxu0 0.0
    %152 = vmatmul.mubr.f32.gmra.mrb[0].mxu0 %v60
    %v153 = vpop.f32.mrb[0].mxu0
    %v154 = vadd.f32 %v50, %v153
    %v155 = vpop.f32.mrb[0].mxu0
    %156 = vmatprep.mubr.f32.mxu0 0.0
    %157 = vmatmul.mubr.f32.gmra.mrb[0].mxu0 %v63
    %v158 = vpop.f32.mrb[0].mxu0
    %v159 = vadd.f32 %v50, %v158
    %v160 = vpop.f32.mrb[0].mxu0
    %161 = vmatprep.mubr.f32.mxu0 0.0
    %162 = vmatmul.mubr.f32.gmra.mrb[0].mxu0 %v66
    %v163 = vpop.f32.mrb[0].mxu0
    %v164 = vadd.f32 %v50, %v163
    %v165 = vpop.f32.mrb[0].mxu0
    %166 = vmatprep.mubr.f32.mxu0 0.0
    %167 = vmatmul.mubr.f32.gmra.mrb[0].mxu0 %v69
    %v168 = vpop.f32.mrb[0].mxu0
    %v169 = vadd.f32 %v50, %v168
    %v170 = vpop.f32.mrb[0].mxu0
    %171 = vmatprep.mubr.f32.mxu0 0.0
    %172 = vmatmul.mubr.f32.gmra.mrb[0].mxu0 %v72
    %v173 = vpop.f32.mrb[0].mxu0
    %v174 = vadd.f32 %v50, %v173
    %v175 = vpop.f32.mrb[0].mxu0
    %176 = vmatprep.mubr.f32.mxu0 0.0
    %177 = vmatmul.mubr.f32.gmra.mrb[0].mxu0 %v75
    %v178 = vpop.f32.mrb[0].mxu0
    %v179 = vadd.f32 %v50, %v178
    %v180 = vpop.f32.mrb[0].mxu0
    %181 = vdwg.mxu0
    %v182 = vmax.f32 %v144, 0.0
    %v183 = vmax.f32 %v149, 0.0
    %v184 = vmax.f32 %v154, 0.0
    %v185 = vmax.f32 %v159, 0.0
    %v186 = vmax.f32 %v164, 0.0
    %v187 = vmax.f32 %v169, 0.0
    %v188 = vmax.f32 %v174, 0.0
    %v189 = vmax.f32 %v179, 0.0
    %v190 = vld [vmem:[#allocation2] sm:$0xff]
    %v191 = vld [vmem:[#allocation2 + $0x8] sm:$0xff]
    %v192 = vld [vmem:[#allocation2 + $0x10] sm:$0xff]
    %v193 = vld [vmem:[#allocation2 + $0x18] sm:$0xff]
    %v194 = vld [vmem:[#allocation2 + $0x20] sm:$0xff]
    %v195 = vld [vmem:[#allocation2 + $0x28] sm:$0xff]
    %v196 = vld [vmem:[#allocation2 + $0x30] sm:$0xff]
    %v197 = vld [vmem:[#allocation2 + $0x38] sm:$0xff]
    %v198 = vld [vmem:[#allocation2 + $0x40] sm:$0xff]
    %v199 = vld [vmem:[#allocation2 + $0x48] sm:$0xff]
    %v200 = vld [vmem:[#allocation2 + $0x50] sm:$0xff]
    %v201 = vld [vmem:[#allocation2 + $0x58] sm:$0xff]
    %v202 = vld [vmem:[#allocation2 + $0x60] sm:$0xff]
    %v203 = vld [vmem:[#allocation2 + $0x68] sm:$0xff]
    %v204 = vld [vmem:[#allocation2 + $0x70] sm:$0xff]
    %v205 = vld [vmem:[#allocation2 + $0x78] sm:$0xff]
    %v206 = vld [vmem:[#allocation2 + $0x80] sm:$0xff]
    %v207 = vld [vmem:[#allocation2 + $0x88] sm:$0xff]
    %v208 = vld [vmem:[#allocation2 + $0x90] sm:$0xff]
    %v209 = vld [vmem:[#allocation2 + $0x98] sm:$0xff]
    %v210 = vld [vmem:[#allocation2 + $0xa0] sm:$0xff]
    %v211 = vld [vmem:[#allocation2 + $0xa8] sm:$0xff]
    %v212 = vld [vmem:[#allocation2 + $0xb0] sm:$0xff]
    %v213 = vld [vmem:[#allocation2 + $0xb8] sm:$0xff]
    %v214 = vld [vmem:[#allocation2 + $0xc0] sm:$0xff]
    %v215 = vld [vmem:[#allocation2 + $0xc8] sm:$0xff]
    %v216 = vld [vmem:[#allocation2 + $0xd0] sm:$0xff]
    %v217 = vld [vmem:[#allocation2 + $0xd8] sm:$0xff]
    %v218 = vld [vmem:[#allocation2 + $0xe0] sm:$0xff]
    %v219 = vld [vmem:[#allocation2 + $0xe8] sm:$0xff]
    %v220 = vld [vmem:[#allocation2 + $0xf0] sm:$0xff]
    %v221 = vld [vmem:[#allocation2 + $0xf8] sm:$0xff]
    %v222 = vld [vmem:[#allocation2 + $0x100] sm:$0xff]
    %v223 = vld [vmem:[#allocation2 + $0x108] sm:$0xff]
    %v224 = vld [vmem:[#allocation2 + $0x110] sm:$0xff]
    %v225 = vld [vmem:[#allocation2 + $0x118] sm:$0xff]
    %v226 = vld [vmem:[#allocation2 + $0x120] sm:$0xff]
    %v227 = vld [vmem:[#allocation2 + $0x128] sm:$0xff]
    %v228 = vld [vmem:[#allocation2 + $0x130] sm:$0xff]
    %v229 = vld [vmem:[#allocation2 + $0x138] sm:$0xff]
    %v230 = vld [vmem:[#allocation2 + $0x140] sm:$0xff]
    %v231 = vld [vmem:[#allocation2 + $0x148] sm:$0xff]
    %v232 = vld [vmem:[#allocation2 + $0x150] sm:$0xff]
    %v233 = vld [vmem:[#allocation2 + $0x158] sm:$0xff]
    %v234 = vld [vmem:[#allocation2 + $0x160] sm:$0xff]
    %v235 = vld [vmem:[#allocation2 + $0x168] sm:$0xff]
    %v236 = vld [vmem:[#allocation2 + $0x170] sm:$0xff]
    %v237 = vld [vmem:[#allocation2 + $0x178] sm:$0xff]
    %v238 = vld [vmem:[%s4] sm:$0x7]
    %v240 = vlaneseq
    %v241 = vshrl.u32 %v240, 7
    %v242 = vsub.s32 0, %v241
    %v243 = vrot.slane %v238, %v242
    %v244 = vlaneseq
    %v245 = vshrl.u32 %v244, 7
    %v246 = vsub.s32 1, %v245
    %v247 = vrot.slane %v238, %v246
    %v248 = vlaneseq
    %v249 = vshrl.u32 %v248, 7
    %v250 = vsub.s32 2, %v249
    %v251 = vrot.slane %v238, %v250
    %255 = vmatprep.subr.mxu0 %v191
    %256 = vmatpush1.msra.mxu0 %v190
    %257 = vmatprep.subr.mxu0 %v194
    %258 = vmatpush1.msra.mxu0 %v193
    %259 = vmatprep.subr.mxu0 %v197
    %260 = vmatpush1.msra.mxu0 %v196
    %261 = vmatprep.subr.mxu0 %v200
    %262 = vmatpush1.msra.mxu0 %v199
    %263 = vmatprep.subr.mxu0 %v203
    %264 = vmatpush1.msra.mxu0 %v202
    %265 = vmatprep.subr.mxu0 %v206
    %266 = vmatpush1.msra.mxu0 %v205
    %267 = vmatprep.subr.mxu0 %v209
    %268 = vmatpush1.msra.mxu0 %v208
    %269 = vmatprep.subr.mxu0 %v212
    %270 = vmatpush1.msra.mxu0 %v211
    %271 = vmatprep.subr.mxu0 %v215
    %272 = vmatpush1.msra.mxu0 %v214
    %273 = vmatprep.subr.mxu0 %v218
    %274 = vmatpush1.msra.mxu0 %v217
    %275 = vmatprep.subr.mxu0 %v221
    %276 = vmatpush1.msra.mxu0 %v220
    %277 = vmatprep.subr.mxu0 %v224
    %278 = vmatpush1.msra.mxu0 %v223
    %279 = vmatprep.subr.mxu0 %v227
    %280 = vmatpush1.msra.mxu0 %v226
    %281 = vmatprep.subr.mxu0 %v230
    %282 = vmatpush1.msra.mxu0 %v229
    %283 = vmatprep.subr.mxu0 %v233
    %284 = vmatpush1.msra.mxu0 %v232
    %285 = vmatprep.subr.mxu0 %v236
    %286 = vmatpush1.msra.mxu0 %v235
    %287 = vmatprep.subr.mxu0 0.0
    %288 = vmatpush1.msra.mxu0 0.0
    %289 = vmatprep.subr.mxu0 0.0
    %290 = vmatpush1.msra.mxu0 0.0
    %291 = vmatprep.subr.mxu0 0.0
    %292 = vmatpush1.msra.mxu0 0.0
    %293 = vmatprep.subr.mxu0 0.0
    %294 = vmatpush1.msra.mxu0 0.0
    %295 = vmatprep.subr.mxu0 0.0
    %296 = vmatpush1.msra.mxu0 0.0
    %297 = vmatprep.subr.mxu0 0.0
    %298 = vmatpush1.msra.mxu0 0.0
    %299 = vmatprep.subr.mxu0 0.0
    %300 = vmatpush1.msra.mxu0 0.0
    %301 = vmatprep.subr.mxu0 0.0
    %302 = vmatpush1.msra.mxu0 0.0
    %303 = vmatprep.subr.mxu0 0.0
    %304 = vmatpush1.msra.mxu0 0.0
    %305 = vmatprep.subr.mxu0 0.0
    %306 = vmatpush1.msra.mxu0 0.0
    %307 = vmatprep.subr.mxu0 0.0
    %308 = vmatpush1.msra.mxu0 0.0
    %309 = vmatprep.subr.mxu0 0.0
    %310 = vmatpush1.msra.mxu0 0.0
    %311 = vmatprep.subr.mxu0 0.0
    %312 = vmatpush1.msra.mxu0 0.0
    %313 = vmatprep.subr.mxu0 0.0
    %314 = vmatpush1.msra.mxu0 0.0
    %315 = vmatprep.subr.mxu0 0.0
    %316 = vmatpush1.msra.mxu0 0.0
    %317 = vmatprep.subr.mxu0 0.0
    %318 = vmatpush1.msra.mxu0 0.0
    %319 = vmatprep.mubr.f32.mxu0 0.0
    %320 = vmatmul.mubr.f32.gmra.mrb[0].mxu0 %v182
    %v321 = vpop.f32.mrb[0].mxu0
    %v322 = vadd.f32 %v243, %v321
    %v323 = vpop.f32.mrb[0].mxu0
    %v324 = vadd.f32 %v247, %v323
    %325 = vmatprep.mubr.f32.mxu0 0.0
    %326 = vmatmul.mubr.f32.gmra.mrb[0].mxu0 %v183
    %v327 = vpop.f32.mrb[0].mxu0
    %v328 = vadd.f32 %v243, %v327
    %v329 = vpop.f32.mrb[0].mxu0
    %v330 = vadd.f32 %v247, %v329
    %331 = vmatprep.mubr.f32.mxu0 0.0
    %332 = vmatmul.mubr.f32.gmra.mrb[0].mxu0 %v184
    %v333 = vpop.f32.mrb[0].mxu0
    %v334 = vadd.f32 %v243, %v333
    %v335 = vpop.f32.mrb[0].mxu0
    %v336 = vadd.f32 %v247, %v335
    %337 = vmatprep.mubr.f32.mxu0 0.0
    %338 = vmatmul.mubr.f32.gmra.mrb[0].mxu0 %v185
    %v339 = vpop.f32.mrb[0].mxu0
    %v340 = vadd.f32 %v243, %v339
    %v341 = vpop.f32.mrb[0].mxu0
    %v342 = vadd.f32 %v247, %v341
    %343 = vmatprep.mubr.f32.mxu0 0.0
    %344 = vmatmul.mubr.f32.gmra.mrb[0].mxu0 %v186
    %v345 = vpop.f32.mrb[0].mxu0
    %v346 = vadd.f32 %v243, %v345
    %v347 = vpop.f32.mrb[0].mxu0
    %v348 = vadd.f32 %v247, %v347
    %349 = vmatprep.mubr.f32.mxu0 0.0
    %350 = vmatmul.mubr.f32.gmra.mrb[0].mxu0 %v187
    %v351 = vpop.f32.mrb[0].mxu0
    %v352 = vadd.f32 %v243, %v351
    %v353 = vpop.f32.mrb[0].mxu0
    %v354 = vadd.f32 %v247, %v353
    %355 = vmatprep.mubr.f32.mxu0 0.0
    %356 = vmatmul.mubr.f32.gmra.mrb[0].mxu0 %v188
    %v357 = vpop.f32.mrb[0].mxu0
    %v358 = vadd.f32 %v243, %v357
    %v359 = vpop.f32.mrb[0].mxu0
    %v360 = vadd.f32 %v247, %v359
    %361 = vmatprep.mubr.f32.mxu0 0.0
    %362 = vmatmul.mubr.f32.gmra.mrb[0].mxu0 %v189
    %v363 = vpop.f32.mrb[0].mxu0
    %v364 = vadd.f32 %v243, %v363
    %v365 = vpop.f32.mrb[0].mxu0
    %v366 = vadd.f32 %v247, %v365
    %367 = vdwg.mxu0
    %368 = vmatprep.subr.mxu0 0.0
    %369 = vmatpush1.msra.mxu0 %v192
    %370 = vmatprep.subr.mxu0 0.0
    %371 = vmatpush1.msra.mxu0 %v195
    %372 = vmatprep.subr.mxu0 0.0
    %373 = vmatpush1.msra.mxu0 %v198
    %374 = vmatprep.subr.mxu0 0.0
    %375 = vmatpush1.msra.mxu0 %v201
    %376 = vmatprep.subr.mxu0 0.0
    %377 = vmatpush1.msra.mxu0 %v204
    %378 = vmatprep.subr.mxu0 0.0
    %379 = vmatpush1.msra.mxu0 %v207
    %380 = vmatprep.subr.mxu0 0.0
    %381 = vmatpush1.msra.mxu0 %v210
    %382 = vmatprep.subr.mxu0 0.0
    %383 = vmatpush1.msra.mxu0 %v213
    %384 = vmatprep.subr.mxu0 0.0
    %385 = vmatpush1.msra.mxu0 %v216
    %386 = vmatprep.subr.mxu0 0.0
    %387 = vmatpush1.msra.mxu0 %v219
    %388 = vmatprep.subr.mxu0 0.0
    %389 = vmatpush1.msra.mxu0 %v222
    %390 = vmatprep.subr.mxu0 0.0
    %391 = vmatpush1.msra.mxu0 %v225
    %392 = vmatprep.subr.mxu0 0.0
    %393 = vmatpush1.msra.mxu0 %v228
    %394 = vmatprep.subr.mxu0 0.0
    %395 = vmatpush1.msra.mxu0 %v231
    %396 = vmatprep.subr.mxu0 0.0
    %397 = vmatpush1.msra.mxu0 %v234
    %398 = vmatprep.subr.mxu0 0.0
    %399 = vmatpush1.msra.mxu0 %v237
    %400 = vmatprep.subr.mxu0 0.0
    %401 = vmatpush1.msra.mxu0 0.0
    %402 = vmatprep.subr.mxu0 0.0
    %403 = vmatpush1.msra.mxu0 0.0
    %404 = vmatprep.subr.mxu0 0.0
    %405 = vmatpush1.msra.mxu0 0.0
    %406 = vmatprep.subr.mxu0 0.0
    %407 = vmatpush1.msra.mxu0 0.0
    %408 = vmatprep.subr.mxu0 0.0
    %409 = vmatpush1.msra.mxu0 0.0
    %410 = vmatprep.subr.mxu0 0.0
    %411 = vmatpush1.msra.mxu0 0.0
    %412 = vmatprep.subr.mxu0 0.0
    %413 = vmatpush1.msra.mxu0 0.0
    %414 = vmatprep.subr.mxu0 0.0
    %415 = vmatpush1.msra.mxu0 0.0
    %416 = vmatprep.subr.mxu0 0.0
    %417 = vmatpush1.msra.mxu0 0.0
    %418 = vmatprep.subr.mxu0 0.0
    %419 = vmatpush1.msra.mxu0 0.0
    %420 = vmatprep.subr.mxu0 0.0
    %421 = vmatpush1.msra.mxu0 0.0
    %422 = vmatprep.subr.mxu0 0.0
    %423 = vmatpush1.msra.mxu0 0.0
    %424 = vmatprep.subr.mxu0 0.0
    %425 = vmatpush1.msra.mxu0 0.0
    %426 = vmatprep.subr.mxu0 0.0
    %427 = vmatpush1.msra.mxu0 0.0
    %428 = vmatprep.subr.mxu0 0.0
    %429 = vmatpush1.msra.mxu0 0.0
    %430 = vmatprep.subr.mxu0 0.0
    %431 = vmatpush1.msra.mxu0 0.0
    %432 = vmatprep.mubr.f32.mxu0 0.0
    %433 = vmatmul.mubr.f32.gmra.mrb[0].mxu0 %v182
    %v434 = vpop.f32.mrb[0].mxu0
    %v435 = vadd.f32 %v251, %v434
    %v436 = vpop.f32.mrb[0].mxu0
    %437 = vmatprep.mubr.f32.mxu0 0.0
    %438 = vmatmul.mubr.f32.gmra.mrb[0].mxu0 %v183
    %v439 = vpop.f32.mrb[0].mxu0
    %v440 = vadd.f32 %v251, %v439
    %v441 = vpop.f32.mrb[0].mxu0
    %442 = vmatprep.mubr.f32.mxu0 0.0
    %443 = vmatmul.mubr.f32.gmra.mrb[0].mxu0 %v184
    %v444 = vpop.f32.mrb[0].mxu0
    %v445 = vadd.f32 %v251, %v444
    %v446 = vpop.f32.mrb[0].mxu0
    %447 = vmatprep.mubr.f32.mxu0 0.0
    %448 = vmatmul.mubr.f32.gmra.mrb[0].mxu0 %v185
    %v449 = vpop.f32.mrb[0].mxu0
    %v450 = vadd.f32 %v251, %v449
    %v451 = vpop.f32.mrb[0].mxu0
    %452 = vmatprep.mubr.f32.mxu0 0.0
    %453 = vmatmul.mubr.f32.gmra.mrb[0].mxu0 %v186
    %v454 = vpop.f32.mrb[0].mxu0
    %v455 = vadd.f32 %v251, %v454
    %v456 = vpop.f32.mrb[0].mxu0
    %457 = vmatprep.mubr.f32.mxu0 0.0
    %458 = vmatmul.mubr.f32.gmra.mrb[0].mxu0 %v187
    %v459 = vpop.f32.mrb[0].mxu0
    %v460 = vadd.f32 %v251, %v459
    %v461 = vpop.f32.mrb[0].mxu0
    %462 = vmatprep.mubr.f32.mxu0 0.0
    %463 = vmatmul.mubr.f32.gmra.mrb[0].mxu0 %v188
    %v464 = vpop.f32.mrb[0].mxu0
    %v465 = vadd.f32 %v251, %v464
    %v466 = vpop.f32.mrb[0].mxu0
    %467 = vmatprep.mubr.f32.mxu0 0.0
    %468 = vmatmul.mubr.f32.gmra.mrb[0].mxu0 %v189
    %v469 = vpop.f32.mrb[0].mxu0
    %v470 = vadd.f32 %v251, %v469
    %v471 = vpop.f32.mrb[0].mxu0
    %472 = vdwg.mxu0
    %473 = vst [vmem:[#allocation5] sm:$0xff] %v322
    %474 = vst [vmem:[#allocation5 + $0x8] sm:$0xff] %v324
    %475 = vst [vmem:[#allocation5 + $0x10] sm:$0xff] %v435
    %476 = vst [vmem:[#allocation5 + $0x18] sm:$0xff] %v328
    %477 = vst [vmem:[#allocation5 + $0x20] sm:$0xff] %v330
    %478 = vst [vmem:[#allocation5 + $0x28] sm:$0xff] %v440
    %479 = vst [vmem:[#allocation5 + $0x30] sm:$0xff] %v334
    %480 = vst [vmem:[#allocation5 + $0x38] sm:$0xff] %v336
    %481 = vst [vmem:[#allocation5 + $0x40] sm:$0xff] %v445
    %482 = vst [vmem:[#allocation5 + $0x48] sm:$0xff] %v340
    %483 = vst [vmem:[#allocation5 + $0x50] sm:$0xff] %v342
    %484 = vst [vmem:[#allocation5 + $0x58] sm:$0xff] %v450
    %485 = vst [vmem:[#allocation5 + $0x60] sm:$0xff] %v346
    %486 = vst [vmem:[#allocation5 + $0x68] sm:$0xff] %v348
    %487 = vst [vmem:[#allocation5 + $0x70] sm:$0xff] %v455
    %488 = vst [vmem:[#allocation5 + $0x78] sm:$0xff] %v352
    %489 = vst [vmem:[#allocation5 + $0x80] sm:$0xff] %v354
    %490 = vst [vmem:[#allocation5 + $0x88] sm:$0xff] %v460
    %491 = vst [vmem:[#allocation5 + $0x90] sm:$0xff] %v358
    %492 = vst [vmem:[#allocation5 + $0x98] sm:$0xff] %v360
    %493 = vst [vmem:[#allocation5 + $0xa0] sm:$0xff] %v465
    %494 = vst [vmem:[#allocation5 + $0xa8] sm:$0xff] %v364
    %495 = vst [vmem:[#allocation5 + $0xb0] sm:$0xff] %v366
    %496 = vst [vmem:[#allocation5 + $0xb8] sm:$0xff] %v470
    // Predicated region
    $region26: #{tpu_custom_call.1} parent=1 // pred_check
      _
    $region27: #{tpu_custom_call.1} parent=1 // pred_check_branch
      %498 = sbr.rel (0) target = $region29
    $region28: #{tpu_custom_call.1} parent=1 // pred_region
      %s500 = ssub.s32 3072, 3072
      %501 = vsyncadd [#allocation4], %s500
      %s502 = sshll.u32 [#allocation5], 4
      %s503 = int_to_ptr.vmem [resolvable:$true] %s502
      %508 = dma.vmem_to_hbm [thread:$0]  %s503, 3072, %s5, [#allocation4], 384, 384, 24
    $region29: #{tpu_custom_call.1} parent=1 // pred_fallthru
      _
    // Predicated region
    $region30: #{tpu_custom_call.1} parent=1 // pred_check
      _
    $region31: #{tpu_custom_call.1} parent=1 // pred_check_branch
      %510 = sbr.rel (0) target = $region33
    $region32: #{tpu_custom_call.1} parent=1 // pred_region
      %511 = dma.done [#allocation4], 3072
    $region33: #{tpu_custom_call.1} parent=1 // pred_fallthru
      _
    %512 = vsyncpa [#allocation3], 1
    %513 = vsyncpa [#allocation4], 1

</llo_original>
